<compile_context>
chip_gen: v6e
topology: v6e:2x2x1
jax: 0.10.0
libtpu: 0.0.40
codegen_flags: <defaults>
</compile_context>

<pallas_src>
import jax
import jax.numpy as jnp
from jax import lax
from jax.experimental import pallas as pl
from jax.experimental.pallas import tpu as pltpu

TOK_BLOCK = 256                     # max tokens gathered per grid step
NBUF = 8                            # outstanding row DMAs (semaphore slots)
MAX_OUT_BLOCK_BYTES = 12 << 20      # cap per output buffer (pipeline double-buffers it)


def _round_up(x: int, m: int) -> int:
    return (x + m - 1) // m * m


def _embedding_gather_kernel(ids_ref, table_hbm, out_ref, sems):
    # ids_ref   : SMEM (n_pad,) int32   -- flat token ids (scalar prefetch)
    # table_hbm : HBM  (V, H)           -- raw HBM ref (memory_space=pl.ANY)
    # out_ref   : VMEM (tok_block, H)   -- output block; rows written by DMA
    # sems      : DMA semaphores, shape (NBUF,)
    g = pl.program_id(0)
    tok_block = out_ref.shape[0]
    v = table_hbm.shape[0]
    base = g * tok_block

    def row_id(t):
        # Clamp so an out-of-range id never produces an OOB HBM DMA.
        # (Padded ids are 0 -> gather row 0, sliced off by the wrapper.)
        r = ids_ref[base + t]
        return jnp.minimum(jnp.maximum(r, 0), v - 1)

    def start(t, slot):
        pltpu.make_async_copy(
            table_hbm.at[row_id(t)], out_ref.at[t], sems.at[slot]
        ).start()

    def wait(t, slot):
        # Source row index is irrelevant for the wait (same byte count).
        pltpu.make_async_copy(
            table_hbm.at[0], out_ref.at[t], sems.at[slot]
        ).wait()

    # Prime up to NBUF outstanding row copies.
    for s in range(min(NBUF, tok_block)):
        start(s, s)

    def body(t, carry):
        slot = t % NBUF
        wait(t, slot)                       # row t has landed in out_ref[t]
        nxt = t + NBUF

        @pl.when(nxt < tok_block)
        def _():
            start(nxt, slot)                # reuse the freed semaphore slot
        return carry

    lax.fori_loop(0, tok_block, body, 0)


def text_embedding(indices, table, tok_block: int = TOK_BLOCK):
    """Pallas equivalent of nn.Embedding(vocab_size, hidden_dim)(indices)."""
    B, S = indices.shape
    V, H = table.shape
    N = B * S
    dt_bytes = jnp.dtype(table.dtype).itemsize
    row_bytes = H * dt_bytes

    # Token block: big enough to amortize per-step overhead, never much bigger
    # than the real token count, and small enough that the double-buffered
    # output block fits comfortably in VMEM even for very large hidden dims.
    cap = max(8, (MAX_OUT_BLOCK_BYTES // max(row_bytes, 1)) // 8 * 8)
    tok_block = int(min(tok_block, _round_up(N, 8), cap))
    n_pad = _round_up(N, tok_block)
    num_blocks = n_pad // tok_block

    flat_ids = jnp.pad(indices.reshape(-1).astype(jnp.int32), (0, n_pad - N))
    # TODO(synk): for extremely long sequences (>~256K tokens) the flat id
    # array overflows SMEM; chunk the ids per grid step (HBM->SMEM DMA) instead.

    # Only the double-buffered output block lives in VMEM; the table stays in HBM.
    vmem_limit = int(min(2 * tok_block * row_bytes + (8 << 20), 48 << 20))

    out_flat = pl.pallas_call(
        _embedding_gather_kernel,
        out_shape=jax.ShapeDtypeStruct((n_pad, H), table.dtype),
        grid_spec=pltpu.PrefetchScalarGridSpec(
            num_scalar_prefetch=1,
            grid=(num_blocks,),
            in_specs=[
                # Embedding table: HBM-resident, gathered row-by-row via DMA.
                pl.BlockSpec(memory_space=pl.ANY),
            ],
            out_specs=pl.BlockSpec((tok_block, H), lambda g, ids: (g, 0)),
            scratch_shapes=[pltpu.SemaphoreType.DMA((NBUF,))],
        ),
        compiler_params=pltpu.CompilerParams(
            dimension_semantics=("parallel",),
            vmem_limit_bytes=vmem_limit,
        ),
    )(flat_ids, table)

    return out_flat[:N].reshape(B, S, H)


if __name__ == "__main__":
    vocab_size = 32
    hidden_dim = 32
    batch, seq = 2, 8

    key = jax.random.PRNGKey(0)
    k_idx, k_emb = jax.random.split(key)

    # Deterministic "parameters": nn.Embedding default init is N(0, 1).
    embedding_weight = jax.random.normal(
        k_emb, (vocab_size, hidden_dim), dtype=jnp.float32
    )
    # Token ids.
    x = jax.random.randint(k_idx, (batch, seq), 0, vocab_size, dtype=jnp.int32)

    out = text_embedding(x, embedding_weight)
    out = jax.block_until_ready(out)

    # Reference: plain gather (what nn.Embedding.forward does).
    ref = jnp.take(embedding_weight, x, axis=0)
    assert out.shape == (batch, seq, hidden_dim)
    assert jnp.array_equal(out, ref), "mismatch vs reference embedding lookup"

    print("KERNEL_OK")
</pallas_src>

<mosaic_0001>
module attributes {stable_mosaic.version = 11 : i64} {
  func.func @_embedding_gather_kernel(%arg0: i32, %arg1: memref<16xi32, #tpu.memory_space<smem>>, %arg2: memref<32x32xf32, #tpu.memory_space<any>>, %arg3: memref<16x32xf32, #tpu.memory_space<vmem>>, %arg4: memref<8x!tpu.dma_semaphore, #tpu.memory_space<semaphore_mem>>) attributes {dimension_semantics = [#tpu.dimension_semantics<parallel>], iteration_bounds = array<i64: 1>, scalar_prefetch = 1 : i64, scratch_operands = 1 : i64, tpu.core_type = #tpu.core_type<tc>, window_params = [{}, {transform_indices = @transform_1, window_bounds = array<i64: 16, 32>}]} {
    %c16_i32 = arith.constant 16 : i32
    %0 = arith.muli %arg0, %c16_i32 : i32
    %c0_i32 = arith.constant 0 : i32
    %1 = arith.addi %0, %c0_i32 : i32
    %2 = arith.index_cast %1 : i32 to index
    %3 = memref.load %arg1[%2] : memref<16xi32, #tpu.memory_space<smem>>
    %c0_i32_0 = arith.constant 0 : i32
    %4 = arith.maxsi %3, %c0_i32_0 : i32
    %c31_i32 = arith.constant 31 : i32
    %5 = arith.minsi %4, %c31_i32 : i32
    %c0_i32_1 = arith.constant 0 : i32
    %c0_i32_2 = arith.constant 0 : i32
    %c0_i32_3 = arith.constant 0 : i32
    %6 = tpu.memref_slice %arg2[%5, %c0_i32_3] : memref<32x32xf32, #tpu.memory_space<any>> -> memref<1x32xf32, #tpu.memory_space<any>>
    %7 = tpu.memref_squeeze %6 : memref<1x32xf32, #tpu.memory_space<any>> -> memref<32xf32, #tpu.memory_space<any>>
    %c0_i32_4 = arith.constant 0 : i32
    %8 = tpu.memref_slice %arg3[%c0_i32_1, %c0_i32_4] : memref<16x32xf32, #tpu.memory_space<vmem>> -> memref<1x32xf32, #tpu.memory_space<vmem>>
    %9 = tpu.memref_squeeze %8 : memref<1x32xf32, #tpu.memory_space<vmem>> -> memref<32xf32, #tpu.memory_space<vmem>>
    %10 = tpu.memref_slice %arg4[%c0_i32_2] : memref<8x!tpu.dma_semaphore, #tpu.memory_space<semaphore_mem>> -> memref<1x!tpu.dma_semaphore, #tpu.memory_space<semaphore_mem>>
    %11 = tpu.memref_squeeze %10 : memref<1x!tpu.dma_semaphore, #tpu.memory_space<semaphore_mem>> -> memref<!tpu.dma_semaphore, #tpu.memory_space<semaphore_mem>>
    tpu.enqueue_dma source(%7 : memref<32xf32, #tpu.memory_space<any>>) target(%9 : memref<32xf32, #tpu.memory_space<vmem>>) target_semaphore(%11 : memref<!tpu.dma_semaphore, #tpu.memory_space<semaphore_mem>>)
    %c1_i32 = arith.constant 1 : i32
    %12 = arith.addi %0, %c1_i32 : i32
    %13 = arith.index_cast %12 : i32 to index
    %14 = memref.load %arg1[%13] : memref<16xi32, #tpu.memory_space<smem>>
    %c0_i32_5 = arith.constant 0 : i32
    %15 = arith.maxsi %14, %c0_i32_5 : i32
    %c31_i32_6 = arith.constant 31 : i32
    %16 = arith.minsi %15, %c31_i32_6 : i32
    %c1_i32_7 = arith.constant 1 : i32
    %c1_i32_8 = arith.constant 1 : i32
    %c0_i32_9 = arith.constant 0 : i32
    %17 = tpu.memref_slice %arg2[%16, %c0_i32_9] : memref<32x32xf32, #tpu.memory_space<any>> -> memref<1x32xf32, #tpu.memory_space<any>>
    %18 = tpu.memref_squeeze %17 : memref<1x32xf32, #tpu.memory_space<any>> -> memref<32xf32, #tpu.memory_space<any>>
    %c0_i32_10 = arith.constant 0 : i32
    %19 = tpu.memref_slice %arg3[%c1_i32_7, %c0_i32_10] : memref<16x32xf32, #tpu.memory_space<vmem>> -> memref<1x32xf32, #tpu.memory_space<vmem>>
    %20 = tpu.memref_squeeze %19 : memref<1x32xf32, #tpu.memory_space<vmem>> -> memref<32xf32, #tpu.memory_space<vmem>>
    %21 = tpu.memref_slice %arg4[%c1_i32_8] : memref<8x!tpu.dma_semaphore, #tpu.memory_space<semaphore_mem>> -> memref<1x!tpu.dma_semaphore, #tpu.memory_space<semaphore_mem>>
    %22 = tpu.memref_squeeze %21 : memref<1x!tpu.dma_semaphore, #tpu.memory_space<semaphore_mem>> -> memref<!tpu.dma_semaphore, #tpu.memory_space<semaphore_mem>>
    tpu.enqueue_dma source(%18 : memref<32xf32, #tpu.memory_space<any>>) target(%20 : memref<32xf32, #tpu.memory_space<vmem>>) target_semaphore(%22 : memref<!tpu.dma_semaphore, #tpu.memory_space<semaphore_mem>>)
    %c2_i32 = arith.constant 2 : i32
    %23 = arith.addi %0, %c2_i32 : i32
    %24 = arith.index_cast %23 : i32 to index
    %25 = memref.load %arg1[%24] : memref<16xi32, #tpu.memory_space<smem>>
    %c0_i32_11 = arith.constant 0 : i32
    %26 = arith.maxsi %25, %c0_i32_11 : i32
    %c31_i32_12 = arith.constant 31 : i32
    %27 = arith.minsi %26, %c31_i32_12 : i32
    %c2_i32_13 = arith.constant 2 : i32
    %c2_i32_14 = arith.constant 2 : i32
    %c0_i32_15 = arith.constant 0 : i32
    %28 = tpu.memref_slice %arg2[%27, %c0_i32_15] : memref<32x32xf32, #tpu.memory_space<any>> -> memref<1x32xf32, #tpu.memory_space<any>>
    %29 = tpu.memref_squeeze %28 : memref<1x32xf32, #tpu.memory_space<any>> -> memref<32xf32, #tpu.memory_space<any>>
    %c0_i32_16 = arith.constant 0 : i32
    %30 = tpu.memref_slice %arg3[%c2_i32_13, %c0_i32_16] : memref<16x32xf32, #tpu.memory_space<vmem>> -> memref<1x32xf32, #tpu.memory_space<vmem>>
    %31 = tpu.memref_squeeze %30 : memref<1x32xf32, #tpu.memory_space<vmem>> -> memref<32xf32, #tpu.memory_space<vmem>>
    %32 = tpu.memref_slice %arg4[%c2_i32_14] : memref<8x!tpu.dma_semaphore, #tpu.memory_space<semaphore_mem>> -> memref<1x!tpu.dma_semaphore, #tpu.memory_space<semaphore_mem>>
    %33 = tpu.memref_squeeze %32 : memref<1x!tpu.dma_semaphore, #tpu.memory_space<semaphore_mem>> -> memref<!tpu.dma_semaphore, #tpu.memory_space<semaphore_mem>>
    tpu.enqueue_dma source(%29 : memref<32xf32, #tpu.memory_space<any>>) target(%31 : memref<32xf32, #tpu.memory_space<vmem>>) target_semaphore(%33 : memref<!tpu.dma_semaphore, #tpu.memory_space<semaphore_mem>>)
    %c3_i32 = arith.constant 3 : i32
    %34 = arith.addi %0, %c3_i32 : i32
    %35 = arith.index_cast %34 : i32 to index
    %36 = memref.load %arg1[%35] : memref<16xi32, #tpu.memory_space<smem>>
    %c0_i32_17 = arith.constant 0 : i32
    %37 = arith.maxsi %36, %c0_i32_17 : i32
    %c31_i32_18 = arith.constant 31 : i32
    %38 = arith.minsi %37, %c31_i32_18 : i32
    %c3_i32_19 = arith.constant 3 : i32
    %c3_i32_20 = arith.constant 3 : i32
    %c0_i32_21 = arith.constant 0 : i32
    %39 = tpu.memref_slice %arg2[%38, %c0_i32_21] : memref<32x32xf32, #tpu.memory_space<any>> -> memref<1x32xf32, #tpu.memory_space<any>>
    %40 = tpu.memref_squeeze %39 : memref<1x32xf32, #tpu.memory_space<any>> -> memref<32xf32, #tpu.memory_space<any>>
    %c0_i32_22 = arith.constant 0 : i32
    %41 = tpu.memref_slice %arg3[%c3_i32_19, %c0_i32_22] : memref<16x32xf32, #tpu.memory_space<vmem>> -> memref<1x32xf32, #tpu.memory_space<vmem>>
    %42 = tpu.memref_squeeze %41 : memref<1x32xf32, #tpu.memory_space<vmem>> -> memref<32xf32, #tpu.memory_space<vmem>>
    %43 = tpu.memref_slice %arg4[%c3_i32_20] : memref<8x!tpu.dma_semaphore, #tpu.memory_space<semaphore_mem>> -> memref<1x!tpu.dma_semaphore, #tpu.memory_space<semaphore_mem>>
    %44 = tpu.memref_squeeze %43 : memref<1x!tpu.dma_semaphore, #tpu.memory_space<semaphore_mem>> -> memref<!tpu.dma_semaphore, #tpu.memory_space<semaphore_mem>>
    tpu.enqueue_dma source(%40 : memref<32xf32, #tpu.memory_space<any>>) target(%42 : memref<32xf32, #tpu.memory_space<vmem>>) target_semaphore(%44 : memref<!tpu.dma_semaphore, #tpu.memory_space<semaphore_mem>>)
    %c4_i32 = arith.constant 4 : i32
    %45 = arith.addi %0, %c4_i32 : i32
    %46 = arith.index_cast %45 : i32 to index
    %47 = memref.load %arg1[%46] : memref<16xi32, #tpu.memory_space<smem>>
    %c0_i32_23 = arith.constant 0 : i32
    %48 = arith.maxsi %47, %c0_i32_23 : i32
    %c31_i32_24 = arith.constant 31 : i32
    %49 = arith.minsi %48, %c31_i32_24 : i32
    %c4_i32_25 = arith.constant 4 : i32
    %c4_i32_26 = arith.constant 4 : i32
    %c0_i32_27 = arith.constant 0 : i32
    %50 = tpu.memref_slice %arg2[%49, %c0_i32_27] : memref<32x32xf32, #tpu.memory_space<any>> -> memref<1x32xf32, #tpu.memory_space<any>>
    %51 = tpu.memref_squeeze %50 : memref<1x32xf32, #tpu.memory_space<any>> -> memref<32xf32, #tpu.memory_space<any>>
    %c0_i32_28 = arith.constant 0 : i32
    %52 = tpu.memref_slice %arg3[%c4_i32_25, %c0_i32_28] : memref<16x32xf32, #tpu.memory_space<vmem>> -> memref<1x32xf32, #tpu.memory_space<vmem>>
    %53 = tpu.memref_squeeze %52 : memref<1x32xf32, #tpu.memory_space<vmem>> -> memref<32xf32, #tpu.memory_space<vmem>>
    %54 = tpu.memref_slice %arg4[%c4_i32_26] : memref<8x!tpu.dma_semaphore, #tpu.memory_space<semaphore_mem>> -> memref<1x!tpu.dma_semaphore, #tpu.memory_space<semaphore_mem>>
    %55 = tpu.memref_squeeze %54 : memref<1x!tpu.dma_semaphore, #tpu.memory_space<semaphore_mem>> -> memref<!tpu.dma_semaphore, #tpu.memory_space<semaphore_mem>>
    tpu.enqueue_dma source(%51 : memref<32xf32, #tpu.memory_space<any>>) target(%53 : memref<32xf32, #tpu.memory_space<vmem>>) target_semaphore(%55 : memref<!tpu.dma_semaphore, #tpu.memory_space<semaphore_mem>>)
    %c5_i32 = arith.constant 5 : i32
    %56 = arith.addi %0, %c5_i32 : i32
    %57 = arith.index_cast %56 : i32 to index
    %58 = memref.load %arg1[%57] : memref<16xi32, #tpu.memory_space<smem>>
    %c0_i32_29 = arith.constant 0 : i32
    %59 = arith.maxsi %58, %c0_i32_29 : i32
    %c31_i32_30 = arith.constant 31 : i32
    %60 = arith.minsi %59, %c31_i32_30 : i32
    %c5_i32_31 = arith.constant 5 : i32
    %c5_i32_32 = arith.constant 5 : i32
    %c0_i32_33 = arith.constant 0 : i32
    %61 = tpu.memref_slice %arg2[%60, %c0_i32_33] : memref<32x32xf32, #tpu.memory_space<any>> -> memref<1x32xf32, #tpu.memory_space<any>>
    %62 = tpu.memref_squeeze %61 : memref<1x32xf32, #tpu.memory_space<any>> -> memref<32xf32, #tpu.memory_space<any>>
    %c0_i32_34 = arith.constant 0 : i32
    %63 = tpu.memref_slice %arg3[%c5_i32_31, %c0_i32_34] : memref<16x32xf32, #tpu.memory_space<vmem>> -> memref<1x32xf32, #tpu.memory_space<vmem>>
    %64 = tpu.memref_squeeze %63 : memref<1x32xf32, #tpu.memory_space<vmem>> -> memref<32xf32, #tpu.memory_space<vmem>>
    %65 = tpu.memref_slice %arg4[%c5_i32_32] : memref<8x!tpu.dma_semaphore, #tpu.memory_space<semaphore_mem>> -> memref<1x!tpu.dma_semaphore, #tpu.memory_space<semaphore_mem>>
    %66 = tpu.memref_squeeze %65 : memref<1x!tpu.dma_semaphore, #tpu.memory_space<semaphore_mem>> -> memref<!tpu.dma_semaphore, #tpu.memory_space<semaphore_mem>>
    tpu.enqueue_dma source(%62 : memref<32xf32, #tpu.memory_space<any>>) target(%64 : memref<32xf32, #tpu.memory_space<vmem>>) target_semaphore(%66 : memref<!tpu.dma_semaphore, #tpu.memory_space<semaphore_mem>>)
    %c6_i32 = arith.constant 6 : i32
    %67 = arith.addi %0, %c6_i32 : i32
    %68 = arith.index_cast %67 : i32 to index
    %69 = memref.load %arg1[%68] : memref<16xi32, #tpu.memory_space<smem>>
    %c0_i32_35 = arith.constant 0 : i32
    %70 = arith.maxsi %69, %c0_i32_35 : i32
    %c31_i32_36 = arith.constant 31 : i32
    %71 = arith.minsi %70, %c31_i32_36 : i32
    %c6_i32_37 = arith.constant 6 : i32
    %c6_i32_38 = arith.constant 6 : i32
    %c0_i32_39 = arith.constant 0 : i32
    %72 = tpu.memref_slice %arg2[%71, %c0_i32_39] : memref<32x32xf32, #tpu.memory_space<any>> -> memref<1x32xf32, #tpu.memory_space<any>>
    %73 = tpu.memref_squeeze %72 : memref<1x32xf32, #tpu.memory_space<any>> -> memref<32xf32, #tpu.memory_space<any>>
    %c0_i32_40 = arith.constant 0 : i32
    %74 = tpu.memref_slice %arg3[%c6_i32_37, %c0_i32_40] : memref<16x32xf32, #tpu.memory_space<vmem>> -> memref<1x32xf32, #tpu.memory_space<vmem>>
    %75 = tpu.memref_squeeze %74 : memref<1x32xf32, #tpu.memory_space<vmem>> -> memref<32xf32, #tpu.memory_space<vmem>>
    %76 = tpu.memref_slice %arg4[%c6_i32_38] : memref<8x!tpu.dma_semaphore, #tpu.memory_space<semaphore_mem>> -> memref<1x!tpu.dma_semaphore, #tpu.memory_space<semaphore_mem>>
    %77 = tpu.memref_squeeze %76 : memref<1x!tpu.dma_semaphore, #tpu.memory_space<semaphore_mem>> -> memref<!tpu.dma_semaphore, #tpu.memory_space<semaphore_mem>>
    tpu.enqueue_dma source(%73 : memref<32xf32, #tpu.memory_space<any>>) target(%75 : memref<32xf32, #tpu.memory_space<vmem>>) target_semaphore(%77 : memref<!tpu.dma_semaphore, #tpu.memory_space<semaphore_mem>>)
    %c7_i32 = arith.constant 7 : i32
    %78 = arith.addi %0, %c7_i32 : i32
    %79 = arith.index_cast %78 : i32 to index
    %80 = memref.load %arg1[%79] : memref<16xi32, #tpu.memory_space<smem>>
    %c0_i32_41 = arith.constant 0 : i32
    %81 = arith.maxsi %80, %c0_i32_41 : i32
    %c31_i32_42 = arith.constant 31 : i32
    %82 = arith.minsi %81, %c31_i32_42 : i32
    %c7_i32_43 = arith.constant 7 : i32
    %c7_i32_44 = arith.constant 7 : i32
    %c0_i32_45 = arith.constant 0 : i32
    %83 = tpu.memref_slice %arg2[%82, %c0_i32_45] : memref<32x32xf32, #tpu.memory_space<any>> -> memref<1x32xf32, #tpu.memory_space<any>>
    %84 = tpu.memref_squeeze %83 : memref<1x32xf32, #tpu.memory_space<any>> -> memref<32xf32, #tpu.memory_space<any>>
    %c0_i32_46 = arith.constant 0 : i32
    %85 = tpu.memref_slice %arg3[%c7_i32_43, %c0_i32_46] : memref<16x32xf32, #tpu.memory_space<vmem>> -> memref<1x32xf32, #tpu.memory_space<vmem>>
    %86 = tpu.memref_squeeze %85 : memref<1x32xf32, #tpu.memory_space<vmem>> -> memref<32xf32, #tpu.memory_space<vmem>>
    %87 = tpu.memref_slice %arg4[%c7_i32_44] : memref<8x!tpu.dma_semaphore, #tpu.memory_space<semaphore_mem>> -> memref<1x!tpu.dma_semaphore, #tpu.memory_space<semaphore_mem>>
    %88 = tpu.memref_squeeze %87 : memref<1x!tpu.dma_semaphore, #tpu.memory_space<semaphore_mem>> -> memref<!tpu.dma_semaphore, #tpu.memory_space<semaphore_mem>>
    tpu.enqueue_dma source(%84 : memref<32xf32, #tpu.memory_space<any>>) target(%86 : memref<32xf32, #tpu.memory_space<vmem>>) target_semaphore(%88 : memref<!tpu.dma_semaphore, #tpu.memory_space<semaphore_mem>>)
    %c0_i32_47 = arith.constant 0 : i32
    %c16_i32_48 = arith.constant 16 : i32
    %89 = arith.addi %c0_i32_47, %c16_i32_48 : i32
    %c1_i32_49 = arith.constant 1 : i32
    scf.for %arg5 = %c0_i32_47 to %89 step %c1_i32_49  : i32 {
      %c8_i32 = arith.constant 8 : i32
      %c0_i32_51 = arith.constant 0 : i32
      %90 = arith.cmpi eq, %c8_i32, %c0_i32_51 : i32
      %c1_i32_52 = arith.constant 1 : i32
      %91 = arith.select %90, %c1_i32_52, %c8_i32 : i32
      %92 = arith.remsi %arg5, %91 : i32
      %c0_i32_53 = arith.constant 0 : i32
      %93 = arith.cmpi ne, %92, %c0_i32_53 : i32
      %c0_i32_54 = arith.constant 0 : i32
      %94 = arith.cmpi slt, %92, %c0_i32_54 : i32
      %c0_i32_55 = arith.constant 0 : i32
      %95 = arith.cmpi slt, %91, %c0_i32_55 : i32
      %96 = arith.xori %94, %95 : i1
      %97 = arith.andi %96, %93 : i1
      %98 = arith.addi %92, %91 : i32
      %99 = arith.select %97, %98, %92 : i32
      %c0_i32_56 = arith.constant 0 : i32
      %c0_i32_57 = arith.constant 0 : i32
      %100 = tpu.memref_slice %arg2[%c0_i32_56, %c0_i32_57] : memref<32x32xf32, #tpu.memory_space<any>> -> memref<1x32xf32, #tpu.memory_space<any>>
      %101 = tpu.memref_squeeze %100 : memref<1x32xf32, #tpu.memory_space<any>> -> memref<32xf32, #tpu.memory_space<any>>
      %c0_i32_58 = arith.constant 0 : i32
      %102 = tpu.memref_slice %arg3[%arg5, %c0_i32_58] : memref<16x32xf32, #tpu.memory_space<vmem>> -> memref<1x32xf32, #tpu.memory_space<vmem>>
      %103 = tpu.memref_squeeze %102 : memref<1x32xf32, #tpu.memory_space<vmem>> -> memref<32xf32, #tpu.memory_space<vmem>>
      %104 = tpu.memref_slice %arg4[%99] : memref<8x!tpu.dma_semaphore, #tpu.memory_space<semaphore_mem>> -> memref<1x!tpu.dma_semaphore, #tpu.memory_space<semaphore_mem>>
      %105 = tpu.memref_squeeze %104 : memref<1x!tpu.dma_semaphore, #tpu.memory_space<semaphore_mem>> -> memref<!tpu.dma_semaphore, #tpu.memory_space<semaphore_mem>>
      tpu.wait_dma2 semaphore(%105 : memref<!tpu.dma_semaphore, #tpu.memory_space<semaphore_mem>>) src(%101 : memref<32xf32, #tpu.memory_space<any>>) dst(%103 : memref<32xf32, #tpu.memory_space<vmem>>)
      %c8_i32_59 = arith.constant 8 : i32
      %106 = arith.addi %arg5, %c8_i32_59 : i32
      %c16_i32_60 = arith.constant 16 : i32
      %107 = arith.cmpi slt, %106, %c16_i32_60 : i32
      %108 = arith.extui %107 : i1 to i32
      %c0_i32_61 = arith.constant 0 : i32
      %109 = arith.cmpi ne, %108, %c0_i32_61 : i32
      scf.if %109 {
        %110 = arith.addi %0, %106 : i32
        %111 = arith.index_cast %110 : i32 to index
        %112 = memref.load %arg1[%111] : memref<16xi32, #tpu.memory_space<smem>>
        %c0_i32_62 = arith.constant 0 : i32
        %113 = arith.maxsi %112, %c0_i32_62 : i32
        %c31_i32_63 = arith.constant 31 : i32
        %114 = arith.minsi %113, %c31_i32_63 : i32
        %c0_i32_64 = arith.constant 0 : i32
        %115 = tpu.memref_slice %arg2[%114, %c0_i32_64] : memref<32x32xf32, #tpu.memory_space<any>> -> memref<1x32xf32, #tpu.memory_space<any>>
        %116 = tpu.memref_squeeze %115 : memref<1x32xf32, #tpu.memory_space<any>> -> memref<32xf32, #tpu.memory_space<any>>
        %c0_i32_65 = arith.constant 0 : i32
        %117 = tpu.memref_slice %arg3[%106, %c0_i32_65] : memref<16x32xf32, #tpu.memory_space<vmem>> -> memref<1x32xf32, #tpu.memory_space<vmem>>
        %118 = tpu.memref_squeeze %117 : memref<1x32xf32, #tpu.memory_space<vmem>> -> memref<32xf32, #tpu.memory_space<vmem>>
        %119 = tpu.memref_slice %arg4[%99] : memref<8x!tpu.dma_semaphore, #tpu.memory_space<semaphore_mem>> -> memref<1x!tpu.dma_semaphore, #tpu.memory_space<semaphore_mem>>
        %120 = tpu.memref_squeeze %119 : memref<1x!tpu.dma_semaphore, #tpu.memory_space<semaphore_mem>> -> memref<!tpu.dma_semaphore, #tpu.memory_space<semaphore_mem>>
        tpu.enqueue_dma source(%116 : memref<32xf32, #tpu.memory_space<any>>) target(%118 : memref<32xf32, #tpu.memory_space<vmem>>) target_semaphore(%120 : memref<!tpu.dma_semaphore, #tpu.memory_space<semaphore_mem>>)
      } else {
      }
    }
    %c16_i32_50 = arith.constant 16 : i32
    return
  }
  func.func @transform_1(%arg0: i32, %arg1: memref<16xi32, #tpu.memory_space<smem>>) -> (i32, i32) {
    %c0_i32 = arith.constant 0 : i32
    %c0_i32_0 = arith.constant 0 : i32
    return %arg0, %c0_i32 : i32, i32
  }
}

</mosaic_0001>

<llo_original>
// kernel: tpu_custom_call.1
$region0: #{tpu_custom_call.1}
  #allocation0 [shape = 'u32[]', space=smem, size = 0x4, offset = 0x4, fixed_abs, tag = 'smem constant byte address 0x4 - core index']
  #allocation1 [shape = 'u32[144,128]{1,0:T(1,128)}', space=vmem, size = 0x12000, scoped, tag = 'internal scratch']
  #allocation2 [shape = 's32[8]{0}', space=sflag, size = 0x20, scoped, tag = 'scratch operand']
  #allocation3 [shape = 's32[1]{0}', space=sflag, size = 0x4, scoped, tag = 'scoped memory for tpu_custom_call.1']
  #allocation4 [shape = 'u8[512]{0}', space=smem, size = 0x200, scoped, tag = 'prefetched SMEM operand 0']
  #allocation7 [shape = 's32[]', space=sflag, size = 0x4, offset = 0, fixed_abs, tag = 'sflag constant byte address 0x0 - dummy sync flag']
  #allocation8 [shape = 's32[]', space=sflag, size = 0x4, offset = 0, fixed_abs, tag = 'sflag constant byte address 0x0 - dummy sync flag']
  #allocation9 [shape = 'u32[]', space=smem, size = 0x4, offset = 0x44, fixed_abs, tag = 'smem constant byte address 0x44 - assertion arg 0']
  #allocation10 [shape = 'u32[]', space=smem, size = 0x4, offset = 0x48, fixed_abs, tag = 'smem constant byte address 0x48 - assertion arg 1']
  #allocation11 [shape = 's32[]', space=sflag, size = 0x4, offset = 0, fixed_abs, tag = 'sflag constant byte address 0x0 - dummy sync flag']
  #allocation12 [shape = 's32[]', space=sflag, size = 0x4, offset = 0, fixed_abs, tag = 'sflag constant byte address 0x0 - dummy sync flag']
  #allocation13 [shape = 's32[]', space=sflag, size = 0x4, offset = 0, fixed_abs, tag = 'sflag constant byte address 0x0 - dummy sync flag']
  #allocation14 [shape = 's32[]', space=sflag, size = 0x4, offset = 0, fixed_abs, tag = 'sflag constant byte address 0x0 - dummy sync flag']
  #allocation15 [shape = 's32[]', space=sflag, size = 0x4, offset = 0, fixed_abs, tag = 'sflag constant byte address 0x0 - dummy sync flag']
  #allocation16 [shape = 's32[]', space=sflag, size = 0x4, offset = 0, fixed_abs, tag = 'sflag constant byte address 0x0 - dummy sync flag']
  #allocation17 [shape = 's32[]', space=sflag, size = 0x4, offset = 0, fixed_abs, tag = 'sflag constant byte address 0x0 - dummy sync flag']
  #allocation18 [shape = 's32[]', space=sflag, size = 0x4, offset = 0, fixed_abs, tag = 'sflag constant byte address 0x0 - dummy sync flag']
  #allocation19 [shape = 's32[]', space=sflag, size = 0x4, offset = 0, fixed_abs, tag = 'sflag constant byte address 0x0 - dummy sync flag']
  #allocation20 [shape = 's32[]', space=sflag, size = 0x4, offset = 0, fixed_abs, tag = 'sflag constant byte address 0x0 - dummy sync flag']
  #allocation21 [shape = 's32[]', space=sflag, size = 0x4, offset = 0, fixed_abs, tag = 'sflag constant byte address 0x0 - dummy sync flag']
  #allocation22 [shape = 's32[]', space=sflag, size = 0x4, offset = 0, fixed_abs, tag = 'sflag constant byte address 0x0 - dummy sync flag']
  #allocation23 [shape = 's32[]', space=sflag, size = 0x4, offset = 0, fixed_abs, tag = 'sflag constant byte address 0x0 - dummy sync flag']
  #allocation24 [shape = 's32[]', space=sflag, size = 0x4, offset = 0, fixed_abs, tag = 'sflag constant byte address 0x0 - dummy sync flag']
  #allocation25 [shape = 's32[]', space=sflag, size = 0x4, offset = 0, fixed_abs, tag = 'sflag constant byte address 0x0 - dummy sync flag']
  #allocation26 [shape = 's32[]', space=sflag, size = 0x4, offset = 0, fixed_abs, tag = 'sflag constant byte address 0x0 - dummy sync flag']
  %s0 = inlined_call_operand.hbm [shape: s32[16], index: 0, kind: input, shape index: {}]
  %s1 = inlined_call_operand.hbm [shape: f32[32,32], index: 1, kind: input, shape index: {}]
  %s2 = inlined_call_operand.hbm [shape: f32[16,32], index: 2, kind: output, shape index: {}]
  %s3 = sld [smem:[#allocation0]]
  $region57: #{tpu_custom_call.1} parent=0
    _
  %s5 = ssub.s32 1, %s3
  %s6 = scalar_select 0, %s5, %s3
  %8 = dma.hbm_to_smem %s0, 16, [#allocation4], [#allocation3]
  %9 = dma.done [#allocation3], 16
  %10 = sfence
  $region1: #{tpu_custom_call.1} parent=0
    #allocation5 [shape = 'u8[8192]{0}', space=vmem, size = 0x2000, scoped, tag = 'output window, operand 0, single buffered']
    #allocation6 [shape = 's32[1]{0}', space=sflag, size = 0x4, scoped, tag = 'scoped memory for tpu_custom_call.1']
    %11 = vsyncpa [#allocation6], 0
    %s12 = smul.u32 0, 16
    %s13 = sld [smem:[#allocation4 + %s12]]
    %p14 = scmp.gt.s32.totalorder %s13, 0
    %s15 = scalar_select %p14, %s13, 0
    %p16 = scmp.lt.s32.totalorder %s15, 31
    %s17 = scalar_select %p16, %s15, 31
    %s18 = smul.addr %s17, 16
    %s19 = scalar_lea.hbm %s1, %s18
    // Predicated region
    $region2: #{tpu_custom_call.1} parent=1 // pred_check
      _
    $region3: #{tpu_custom_call.1} parent=1 // pred_check_branch
      %21 = sbr.rel target = $region5
    $region4: #{tpu_custom_call.1} parent=1 // pred_region
      %22 = sst [smem:[#allocation9]] [#allocation8]
      %23 = sst [smem:[#allocation10]] [#allocation7]
    $region5: #{tpu_custom_call.1} parent=1 // pred_fallthru
      _
    %25 = shalt.err (0)
    %s27 = sshll.u32 [#allocation5], 4
    %s28 = int_to_ptr.vmem [resolvable:$true] %s27
    %30 = dma.hbm_to_vmem [thread:$0]  %s19, 16, %s28, [#allocation2]
    %s31 = sadd.s32 %s12, 1
    %s32 = sld [smem:[#allocation4 + %s31]]
    %p33 = scmp.gt.s32.totalorder %s32, 0
    %s34 = scalar_select %p33, %s32, 0
    %p35 = scmp.lt.s32.totalorder %s34, 31
    %s36 = scalar_select %p35, %s34, 31
    %s37 = smul.addr %s36, 16
    %s38 = scalar_lea.hbm %s1, %s37
    %s39 = scalar_lea.vmem [#allocation5], 1
    %s40 = scalar_lea.sflag [#allocation2], 1
    // Predicated region
    $region6: #{tpu_custom_call.1} parent=1 // pred_check
      _
    $region7: #{tpu_custom_call.1} parent=1 // pred_check_branch
      %42 = sbr.rel target = $region9
    $region8: #{tpu_custom_call.1} parent=1 // pred_region
      %43 = sst [smem:[#allocation9]] [#allocation12]
      %44 = sst [smem:[#allocation10]] [#allocation11]
    $region9: #{tpu_custom_call.1} parent=1 // pred_fallthru
      _
    %46 = shalt.err (0)
    %s48 = sshll.u32 %s39, 4
    %s49 = int_to_ptr.vmem [resolvable:$true] %s48
    %51 = dma.hbm_to_vmem [thread:$0]  %s38, 16, %s49, %s40
    %s52 = sadd.s32 %s12, 2
    %s53 = sld [smem:[#allocation4 + %s52]]
    %p54 = scmp.gt.s32.totalorder %s53, 0
    %s55 = scalar_select %p54, %s53, 0
    %p56 = scmp.lt.s32.totalorder %s55, 31
    %s57 = scalar_select %p56, %s55, 31
    %s58 = smul.addr %s57, 16
    %s59 = scalar_lea.hbm %s1, %s58
    %s60 = scalar_lea.vmem [#allocation5], 2
    %s61 = scalar_lea.sflag [#allocation2], 2
    // Predicated region
    $region10: #{tpu_custom_call.1} parent=1 // pred_check
      _
    $region11: #{tpu_custom_call.1} parent=1 // pred_check_branch
      %63 = sbr.rel target = $region13
    $region12: #{tpu_custom_call.1} parent=1 // pred_region
      %64 = sst [smem:[#allocation9]] [#allocation14]
      %65 = sst [smem:[#allocation10]] [#allocation13]
    $region13: #{tpu_custom_call.1} parent=1 // pred_fallthru
      _
    %67 = shalt.err (0)
    %s69 = sshll.u32 %s60, 4
    %s70 = int_to_ptr.vmem [resolvable:$true] %s69
    %72 = dma.hbm_to_vmem [thread:$0]  %s59, 16, %s70, %s61
    %s73 = sadd.s32 %s12, 3
    %s74 = sld [smem:[#allocation4 + %s73]]
    %p75 = scmp.gt.s32.totalorder %s74, 0
    %s76 = scalar_select %p75, %s74, 0
    %p77 = scmp.lt.s32.totalorder %s76, 31
    %s78 = scalar_select %p77, %s76, 31
    %s79 = smul.addr %s78, 16
    %s80 = scalar_lea.hbm %s1, %s79
    %s81 = scalar_lea.vmem [#allocation5], 3
    %s82 = scalar_lea.sflag [#allocation2], 3
    // Predicated region
    $region14: #{tpu_custom_call.1} parent=1 // pred_check
      _
    $region15: #{tpu_custom_call.1} parent=1 // pred_check_branch
      %84 = sbr.rel target = $region17
    $region16: #{tpu_custom_call.1} parent=1 // pred_region
      %85 = sst [smem:[#allocation9]] [#allocation16]
      %86 = sst [smem:[#allocation10]] [#allocation15]
    $region17: #{tpu_custom_call.1} parent=1 // pred_fallthru
      _
    %88 = shalt.err (0)
    %s90 = sshll.u32 %s81, 4
    %s91 = int_to_ptr.vmem [resolvable:$true] %s90
    %93 = dma.hbm_to_vmem [thread:$0]  %s80, 16, %s91, %s82
    %s94 = sadd.s32 %s12, 4
    %s95 = sld [smem:[#allocation4 + %s94]]
    %p96 = scmp.gt.s32.totalorder %s95, 0
    %s97 = scalar_select %p96, %s95, 0
    %p98 = scmp.lt.s32.totalorder %s97, 31
    %s99 = scalar_select %p98, %s97, 31
    %s100 = smul.addr %s99, 16
    %s101 = scalar_lea.hbm %s1, %s100
    %s102 = scalar_lea.vmem [#allocation5], 4
    %s103 = scalar_lea.sflag [#allocation2], 4
    // Predicated region
    $region18: #{tpu_custom_call.1} parent=1 // pred_check
      _
    $region19: #{tpu_custom_call.1} parent=1 // pred_check_branch
      %105 = sbr.rel target = $region21
    $region20: #{tpu_custom_call.1} parent=1 // pred_region
      %106 = sst [smem:[#allocation9]] [#allocation18]
      %107 = sst [smem:[#allocation10]] [#allocation17]
    $region21: #{tpu_custom_call.1} parent=1 // pred_fallthru
      _
    %109 = shalt.err (0)
    %s111 = sshll.u32 %s102, 4
    %s112 = int_to_ptr.vmem [resolvable:$true] %s111
    %114 = dma.hbm_to_vmem [thread:$0]  %s101, 16, %s112, %s103
    %s115 = sadd.s32 %s12, 5
    %s116 = sld [smem:[#allocation4 + %s115]]
    %p117 = scmp.gt.s32.totalorder %s116, 0
    %s118 = scalar_select %p117, %s116, 0
    %p119 = scmp.lt.s32.totalorder %s118, 31
    %s120 = scalar_select %p119, %s118, 31
    %s121 = smul.addr %s120, 16
    %s122 = scalar_lea.hbm %s1, %s121
    %s123 = scalar_lea.vmem [#allocation5], 5
    %s124 = scalar_lea.sflag [#allocation2], 5
    // Predicated region
    $region22: #{tpu_custom_call.1} parent=1 // pred_check
      _
    $region23: #{tpu_custom_call.1} parent=1 // pred_check_branch
      %126 = sbr.rel target = $region25
    $region24: #{tpu_custom_call.1} parent=1 // pred_region
      %127 = sst [smem:[#allocation9]] [#allocation20]
      %128 = sst [smem:[#allocation10]] [#allocation19]
    $region25: #{tpu_custom_call.1} parent=1 // pred_fallthru
      _
    %130 = shalt.err (0)
    %s132 = sshll.u32 %s123, 4
    %s133 = int_to_ptr.vmem [resolvable:$true] %s132
    %135 = dma.hbm_to_vmem [thread:$0]  %s122, 16, %s133, %s124
    %s136 = sadd.s32 %s12, 6
    %s137 = sld [smem:[#allocation4 + %s136]]
    %p138 = scmp.gt.s32.totalorder %s137, 0
    %s139 = scalar_select %p138, %s137, 0
    %p140 = scmp.lt.s32.totalorder %s139, 31
    %s141 = scalar_select %p140, %s139, 31
    %s142 = smul.addr %s141, 16
    %s143 = scalar_lea.hbm %s1, %s142
    %s144 = scalar_lea.vmem [#allocation5], 6
    %s145 = scalar_lea.sflag [#allocation2], 6
    // Predicated region
    $region26: #{tpu_custom_call.1} parent=1 // pred_check
      _
    $region27: #{tpu_custom_call.1} parent=1 // pred_check_branch
      %147 = sbr.rel target = $region29
    $region28: #{tpu_custom_call.1} parent=1 // pred_region
      %148 = sst [smem:[#allocation9]] [#allocation22]
      %149 = sst [smem:[#allocation10]] [#allocation21]
    $region29: #{tpu_custom_call.1} parent=1 // pred_fallthru
      _
    %151 = shalt.err (0)
    %s153 = sshll.u32 %s144, 4
    %s154 = int_to_ptr.vmem [resolvable:$true] %s153
    %156 = dma.hbm_to_vmem [thread:$0]  %s143, 16, %s154, %s145
    %s157 = sadd.s32 %s12, 7
    %s158 = sld [smem:[#allocation4 + %s157]]
    %p159 = scmp.gt.s32.totalorder %s158, 0
    %s160 = scalar_select %p159, %s158, 0
    %p161 = scmp.lt.s32.totalorder %s160, 31
    %s162 = scalar_select %p161, %s160, 31
    %s163 = smul.addr %s162, 16
    %s164 = scalar_lea.hbm %s1, %s163
    %s165 = scalar_lea.vmem [#allocation5], 7
    %s166 = scalar_lea.sflag [#allocation2], 7
    // Predicated region
    $region30: #{tpu_custom_call.1} parent=1 // pred_check
      _
    $region31: #{tpu_custom_call.1} parent=1 // pred_check_branch
      %168 = sbr.rel target = $region33
    $region32: #{tpu_custom_call.1} parent=1 // pred_region
      %169 = sst [smem:[#allocation9]] [#allocation24]
      %170 = sst [smem:[#allocation10]] [#allocation23]
    $region33: #{tpu_custom_call.1} parent=1 // pred_fallthru
      _
    %172 = shalt.err (0)
    %s174 = sshll.u32 %s165, 4
    %s175 = int_to_ptr.vmem [resolvable:$true] %s174
    %177 = dma.hbm_to_vmem [thread:$0]  %s164, 16, %s175, %s166
    loop: start=0, step=1, limit=16
    $region34: #{tpu_custom_call.1} parent=1 // loop_pre_header
      _
    $region35: #{tpu_custom_call.1} parent=1 // loop_header
      %s179 = sphi 0, %s183
      %p180 = scmp.ge.s32.totalorder %s179, 16
    $region36: #{tpu_custom_call.1} parent=1 // loop_header_branch
      %182 = sbr.rel (%p180) target = $region40
    $region37: #{tpu_custom_call.1} parent=1 // loop_body
      %p184 = scmp.lt.s32.totalorder %s179, 0
      %s185 = ssub.s32 0, %s179
      %s186 = scalar_select %p184, %s185, %s179
      %s187 = sand.u32 %s186, 7
      %s188 = ssub.s32 0, %s187
      %s189 = scalar_select %p184, %s188, %s187
      %p190 = scmp.ne.s32.totalorder %s189, 0
      %p191 = scmp.lt.s32.totalorder %s189, 0
      %p192 = pnand %p191, %p190
      %p193 = pneg %p192
      %s194 = sadd.s32 %s189, 8
      %s195 = scalar_select %p193, %s194, %s189
      %s196 = scalar_lea.sflag [#allocation2], %s195
      %198 = dma.done %s196, 16
      %s199 = sadd.s32 %s179, 8
      %p200 = scmp.lt.s32.totalorder %s199, 16
      // Predicated region
      $region41: #{tpu_custom_call.1} parent=37 // pred_check
        %p201 = pneg %p200
      $region42: #{tpu_custom_call.1} parent=37 // pred_check_branch
        %203 = sbr.rel (%p201) target = $region44
      $region43: #{tpu_custom_call.1} parent=37 // pred_region
        %s204 = sadd.s32 %s12, %s199
        %s205 = sld [smem:[#allocation4 + %s204]]
        %p206 = scmp.gt.s32.totalorder %s205, 0
        %s207 = scalar_select %p206, %s205, 0
        %p208 = scmp.lt.s32.totalorder %s207, 31
        %s209 = scalar_select %p208, %s207, 31
        %s210 = smul.addr %s209, 16
        %s211 = scalar_lea.hbm %s1, %s210
        %s212 = scalar_lea.vmem [#allocation5], %s199
        // Predicated region
        $region45: #{tpu_custom_call.1} parent=43 // pred_check
          _
        $region46: #{tpu_custom_call.1} parent=43 // pred_check_branch
          %214 = sbr.rel target = $region48
        $region47: #{tpu_custom_call.1} parent=43 // pred_region
          %215 = sst [smem:[#allocation9]] [#allocation26]
          %216 = sst [smem:[#allocation10]] [#allocation25]
        $region48: #{tpu_custom_call.1} parent=43 // pred_fallthru
          _
        %218 = shalt.err (0)
        %s220 = sshll.u32 %s212, 4
        %s221 = int_to_ptr.vmem [resolvable:$true] %s220
        %223 = dma.hbm_to_vmem [thread:$0]  %s211, 16, %s221, %s196
      $region44: #{tpu_custom_call.1} parent=37 // pred_fallthru
        _
    $region38: #{tpu_custom_call.1} parent=1 // loop_footer
      %s183 = sadd.s32 1, %s179
    $region39: #{tpu_custom_call.1} parent=1 // loop_footer_branch
      %178 = sbr.rel target = $region35
    $region40: #{tpu_custom_call.1} parent=1 // loop_exit
      _
    // Predicated region
    $region49: #{tpu_custom_call.1} parent=1 // pred_check
      _
    $region50: #{tpu_custom_call.1} parent=1 // pred_check_branch
      %225 = sbr.rel (0) target = $region52
    $region51: #{tpu_custom_call.1} parent=1 // pred_region
      %s227 = ssub.s32 256, 256
      %228 = vsyncadd [#allocation6], %s227
      %s229 = sshll.u32 [#allocation5], 4
      %s230 = int_to_ptr.vmem [resolvable:$true] %s229
      %235 = dma.vmem_to_hbm [thread:$0]  %s230, 256, %s2, [#allocation6], 128, 128, 8
    $region52: #{tpu_custom_call.1} parent=1 // pred_fallthru
      _
    // Predicated region
    $region53: #{tpu_custom_call.1} parent=1 // pred_check
      _
    $region54: #{tpu_custom_call.1} parent=1 // pred_check_branch
      %237 = sbr.rel (0) target = $region56
    $region55: #{tpu_custom_call.1} parent=1 // pred_region
      %238 = dma.done [#allocation6], 256
    $region56: #{tpu_custom_call.1} parent=1 // pred_fallthru
      _
    %239 = vsyncpa [#allocation6], 1
  %240 = vsyncmov [#allocation2]
  %s241 = vpop.sfrf %240
  %p242 = scmp.eq.s32.totalorder %s241, 0
  %p243 = pneg %p242
  %245 = shalt.err (%p243)
  %s246 = scalar_lea.sflag [#allocation2], 1
  %247 = vsyncmov %s246
  %s248 = vpop.sfrf %247
  %p249 = scmp.eq.s32.totalorder %s248, 0
  %p250 = pneg %p249
  %252 = shalt.err (%p250)
  %s253 = scalar_lea.sflag [#allocation2], 2
  %254 = vsyncmov %s253
  %s255 = vpop.sfrf %254
  %p256 = scmp.eq.s32.totalorder %s255, 0
  %p257 = pneg %p256
  %259 = shalt.err (%p257)
  %s260 = scalar_lea.sflag [#allocation2], 3
  %261 = vsyncmov %s260
  %s262 = vpop.sfrf %261
  %p263 = scmp.eq.s32.totalorder %s262, 0
  %p264 = pneg %p263
  %266 = shalt.err (%p264)
  %s267 = scalar_lea.sflag [#allocation2], 4
  %268 = vsyncmov %s267
  %s269 = vpop.sfrf %268
  %p270 = scmp.eq.s32.totalorder %s269, 0
  %p271 = pneg %p270
  %273 = shalt.err (%p271)
  %s274 = scalar_lea.sflag [#allocation2], 5
  %275 = vsyncmov %s274
  %s276 = vpop.sfrf %275
  %p277 = scmp.eq.s32.totalorder %s276, 0
  %p278 = pneg %p277
  %280 = shalt.err (%p278)
  %s281 = scalar_lea.sflag [#allocation2], 6
  %282 = vsyncmov %s281
  %s283 = vpop.sfrf %282
  %p284 = scmp.eq.s32.totalorder %s283, 0
  %p285 = pneg %p284
  %287 = shalt.err (%p285)
  %s288 = scalar_lea.sflag [#allocation2], 7
  %289 = vsyncmov %s288
  %s290 = vpop.sfrf %289
  %p291 = scmp.eq.s32.totalorder %s290, 0
  %p292 = pneg %p291
  %294 = shalt.err (%p292)

</llo_original>
